<compile_context>
chip_gen: v7x
topology: tpu7x:2x2x1
jax: 0.10.0
libtpu: 0.0.40
codegen_flags: <defaults>
</compile_context>

<pallas_src>
import functools

import jax
import jax.numpy as jnp
from jax import lax
from jax.experimental import pallas as pl
from jax.experimental.pallas import tpu as pltpu


def _round_up(x, m):
    return (x + m - 1) // m * m


@functools.lru_cache(maxsize=None)
def _vmem_limit_bytes():
    """Generation-aware VMEM limit: ~96 MiB on 128-MiB parts (v5e/v6e),
    ~48 MiB on v7x's 64-MiB-per-TensorCore parts."""
    try:
        cap = int(pltpu.get_tpu_info().vmem_capacity_bytes)
    except Exception:
        cap = 64 << 20                         # conservative fallback (v7x per-TC)
    return int(max(32 << 20, min(cap * 3 // 4, 112 << 20)))


def _pad_features(x, compute_dtype=None):
    """(B,C,H,W) -> zero-padded (n_pad, hw_pad) feature matrix.

    * H*W is padded only to the 128-lane boundary (never to a tile multiple),
      so lane-aligned feature maps stream from HBM with no extra pad copy and
      unaligned ones pad at most 127 columns.
    * Rows are padded to the dtype-aware sublane pack (8 f32 / 16 bf16 / 32 i8)
      so the MXU feed uses fully populated packed vregs.
    Zero rows/cols leave F @ F^T unchanged, so numerics are identical.
    """
    b, c, h, w = x.shape
    n, hw = b * c, h * w
    f = x.reshape(n, hw)
    if compute_dtype is not None and f.dtype != jnp.dtype(compute_dtype):
        f = f.astype(compute_dtype)            # optional bandwidth knob (bf16)
    itemsize = jnp.dtype(f.dtype).itemsize
    sub = max(8, 32 // itemsize)
    n_pad = _round_up(max(n, sub), sub)
    hw_pad = _round_up(hw, 128)
    if (n_pad, hw_pad) != (n, hw):
        f = jnp.pad(f, ((0, n_pad - n), (0, hw_pad - hw)))
    return f, n


def _choose_tk(n_pad, hw_pad, itemsize, resident_bytes, vmem_limit,
               max_tile_cols=None):
    """Largest 128-multiple K tile that (a) exactly divides hw_pad (so no
    wrapper-side re-pad of H*W is ever needed) and (b) keeps two double-
    buffered feature tiles plus the resident Gram/target buffers under the
    per-generation VMEM limit."""
    budget = vmem_limit - resident_bytes - (4 << 20)      # Mosaic headroom
    per_buf = max(budget // 2, 128 * n_pad * itemsize)    # 2 feature buffers
    cap_cols = max(128, (per_buf // (n_pad * itemsize)) // 128 * 128)
    if max_tile_cols is not None:
        cap_cols = max(128, min(cap_cols, max_tile_cols // 128 * 128))
    m = hw_pad // 128
    d = 1
    for cand in range(max(1, min(m, cap_cols // 128)), 0, -1):
        if m % cand == 0:
            d = cand
            break
    return 128 * d


def _auto_split(n_pad, hw_pad, itemsize, num_k):
    """Enable the dual-TensorCore K split only when it is ~free even on single
    TC chips: partial-Gram writeback + combine traffic must be <~3% of the
    feature stream (typical style transfer: H*W >> B*C)."""
    if num_k < 2 or num_k % 2:
        return False
    extra = 6 * n_pad * n_pad * 4
    stream = n_pad * hw_pad * itemsize
    return extra * 32 <= stream


# --------------------------------------------------------------------------
# Kernels
# --------------------------------------------------------------------------
def _gram_kernel(f_ref, g_ref, *, inv_norm, precision, k_axis=0):
    """Accumulate G = F @ F^T directly into the resident output block over the
    K grid axis `k_axis`; scale by inv_norm at the last step."""
    k = pl.program_id(k_axis)

    @pl.when(k == 0)
    def _():
        g_ref[...] = jnp.zeros_like(g_ref)

    f = f_ref[...]
    g_ref[...] += lax.dot_general(
        f, f,
        dimension_numbers=(((1,), (1,)), ((), ())),   # contract shared K axis
        preferred_element_type=jnp.float32,
        precision=precision)

    @pl.when(k == pl.num_programs(k_axis) - 1)
    def _():
        g_ref[...] = g_ref[...] * inv_norm


def _gram_loss_kernel(f_ref, tgt_ref, g_ref, loss_ref, *, inv_norm, inv_n2,
                      precision):
    """Fused: accumulate G into the output block, then MSE vs the target Gram."""
    k = pl.program_id(0)

    @pl.when(k == 0)
    def _():
        g_ref[...] = jnp.zeros_like(g_ref)

    f = f_ref[...]
    g_ref[...] += lax.dot_general(
        f, f,
        dimension_numbers=(((1,), (1,)), ((), ())),
        preferred_element_type=jnp.float32,
        precision=precision)

    @pl.when(k == pl.num_programs(0) - 1)
    def _():
        g = g_ref[...] * inv_norm                     # G / (B*C*H*W)
        g_ref[...] = g
        diff = g - tgt_ref[...]                       # padded region is 0 - 0
        loss_ref[...] = (jnp.sum(diff * diff) * inv_n2).reshape(1, 1).astype(
            loss_ref.dtype)


def _combine_loss_kernel(parts_ref, tgt_ref, g_ref, loss_ref, *, inv_n2, n_pad):
    """Tiny finalize pass for the split path: sum the two partial Grams + MSE."""
    g = parts_ref[pl.ds(0, n_pad), :] + parts_ref[pl.ds(n_pad, n_pad), :]
    g_ref[...] = g
    diff = g - tgt_ref[...]
    loss_ref[...] = (jnp.sum(diff * diff) * inv_n2).reshape(1, 1).astype(
        loss_ref.dtype)


# --------------------------------------------------------------------------
# Wrappers
# --------------------------------------------------------------------------
def _gram_padded(x, *, compute_dtype=None, precision=None, max_tile_cols=None):
    """Returns (padded Gram matrix (n_pad, n_pad) f32, original n)."""
    b, c, h, w = x.shape
    f, n = _pad_features(x, compute_dtype)
    n_pad, hw_pad = f.shape
    itemsize = jnp.dtype(f.dtype).itemsize
    inv_norm = 1.0 / float(b * c * h * w)
    vmem_limit = _vmem_limit_bytes()
    resident = 2 * n_pad * n_pad * 4                   # resident Gram output
    tk = _choose_tk(n_pad, hw_pad, itemsize, resident, vmem_limit, max_tile_cols)

    kernel = functools.partial(_gram_kernel, inv_norm=inv_norm,
                               precision=precision, k_axis=0)
    g = pl.pallas_call(
        kernel,
        out_shape=jax.ShapeDtypeStruct((n_pad, n_pad), jnp.float32),
        grid_spec=pltpu.PrefetchScalarGridSpec(
            num_scalar_prefetch=0,
            grid=(hw_pad // tk,),
            in_specs=[pl.BlockSpec((n_pad, tk), lambda k: (0, k))],
            out_specs=pl.BlockSpec((n_pad, n_pad), lambda k: (0, 0)),
        ),
        compiler_params=pltpu.CompilerParams(
            dimension_semantics=("arbitrary",),
            vmem_limit_bytes=vmem_limit),
    )(f)
    return g, n


def _gram_and_loss_padded(x, target_pad, *, compute_dtype=None, precision=None,
                          max_tile_cols=None, split=None):
    """Returns (padded Gram of x (f32), scalar MSE loss vs the target Gram)."""
    b, c, h, w = x.shape
    f, n = _pad_features(x, compute_dtype)
    n_pad, hw_pad = f.shape
    itemsize = jnp.dtype(f.dtype).itemsize
    inv_norm = 1.0 / float(b * c * h * w)
    inv_n2 = 1.0 / float(n * n)                        # original N, not padded
    vmem_limit = _vmem_limit_bytes()
    # Residents alongside the double-buffered feature tiles: Gram output and
    # constant target block (each conservatively counted double-buffered).
    resident = 4 * n_pad * n_pad * 4
    tk = _choose_tk(n_pad, hw_pad, itemsize, resident, vmem_limit, max_tile_cols)
    num_k = hw_pad // tk

    tgt = target_pad
    if tgt.shape != (n_pad, n_pad):                    # re-pad if dtype padding differs
        tgt = jnp.pad(tgt[:n, :n], ((0, n_pad - n), (0, n_pad - n)))

    if split is None:
        split = _auto_split(n_pad, hw_pad, itemsize, num_k)
    split = bool(split) and num_k >= 2 and num_k % 2 == 0

    if split:
        # Phase 1: two partial Grams on a leading "parallel" axis so both v7x
        # TensorCores each stream half of the feature tensor.
        half = num_k // 2
        kernel = functools.partial(_gram_kernel, inv_norm=inv_norm,
                                   precision=precision, k_axis=1)
        parts = pl.pallas_call(
            kernel,
            out_shape=jax.ShapeDtypeStruct((2 * n_pad, n_pad), jnp.float32),
            grid_spec=pltpu.PrefetchScalarGridSpec(
                num_scalar_prefetch=0,
                grid=(2, half),
                in_specs=[pl.BlockSpec((n_pad, tk),
                                       lambda p, k: (0, p * half + k))],
                out_specs=pl.BlockSpec((n_pad, n_pad), lambda p, k: (p, 0)),
            ),
            compiler_params=pltpu.CompilerParams(
                dimension_semantics=("parallel", "arbitrary"),
                vmem_limit_bytes=vmem_limit),
        )(f)

        # Phase 2: tiny combine + MSE kernel.
        combine = functools.partial(_combine_loss_kernel, inv_n2=inv_n2,
                                    n_pad=n_pad)
        g, loss = pl.pallas_call(
            combine,
            out_shape=(
                jax.ShapeDtypeStruct((n_pad, n_pad), jnp.float32),
                jax.ShapeDtypeStruct((1, 1), jnp.float32),
            ),
            grid_spec=pltpu.PrefetchScalarGridSpec(
                num_scalar_prefetch=0,
                grid=(1,),
                in_specs=[
                    pl.BlockSpec((2 * n_pad, n_pad), lambda i: (0, 0)),
                    pl.BlockSpec((n_pad, n_pad), lambda i: (0, 0)),
                ],
                out_specs=[
                    pl.BlockSpec((n_pad, n_pad), lambda i: (0, 0)),
                    pl.BlockSpec((1, 1), lambda i: (0, 0)),
                ],
            ),
            compiler_params=pltpu.CompilerParams(
                dimension_semantics=("arbitrary",),
                vmem_limit_bytes=vmem_limit),
        )(parts, tgt)
        return g, loss[0, 0]

    # Fused single-pass path (default).
    kernel = functools.partial(_gram_loss_kernel, inv_norm=inv_norm,
                               inv_n2=inv_n2, precision=precision)
    g, loss = pl.pallas_call(
        kernel,
        out_shape=(
            jax.ShapeDtypeStruct((n_pad, n_pad), jnp.float32),
            jax.ShapeDtypeStruct((1, 1), jnp.float32),
        ),
        grid_spec=pltpu.PrefetchScalarGridSpec(
            num_scalar_prefetch=0,
            grid=(num_k,),
            in_specs=[
                pl.BlockSpec((n_pad, tk), lambda k: (0, k)),
                # TODO(synk): pipeline_mode=pl.Buffered(1) on this constant-index
                # target input would free one n_pad^2 f32 VMEM buffer.
                pl.BlockSpec((n_pad, n_pad), lambda k: (0, 0)),
            ],
            out_specs=[
                pl.BlockSpec((n_pad, n_pad), lambda k: (0, 0)),
                pl.BlockSpec((1, 1), lambda k: (0, 0)),
            ],
        ),
        compiler_params=pltpu.CompilerParams(
            dimension_semantics=("arbitrary",),
            vmem_limit_bytes=vmem_limit),
    )(f, tgt)
    return g, loss[0, 0]


def gram_matrix(x, *, compute_dtype=None, precision=None):
    """x: (B, C, H, W) -> normalized Gram matrix (B*C, B*C), like PyTorch."""
    g_pad, n = _gram_padded(x, compute_dtype=compute_dtype, precision=precision)
    return g_pad[:n, :n]


class StyleLoss:
    """JAX/Pallas port of the PyTorch StyleLoss module.

    __call__(x) returns x unchanged and stores mse_loss(gram(x), target) in
    self.loss, exactly like the PyTorch module.
    """

    def __init__(self, target_feature, *, compute_dtype=None, precision=None):
        b, c, _, _ = target_feature.shape
        self._n = b * c
        self._compute_dtype = compute_dtype
        self._precision = precision
        g_pad, _ = _gram_padded(target_feature, compute_dtype=compute_dtype,
                                precision=precision)
        self._target_pad = g_pad                       # padded rows/cols are exactly 0
        self.target = g_pad[: self._n, : self._n]
        # NOTE: like the PyTorch module, self.loss is a side-effect attribute;
        # under jax.jit it becomes a traced value -- return it explicitly there.
        self.loss = jnp.float32(0.0)

    def __call__(self, x, *, max_tile_cols=None, split=None):
        b, c, _, _ = x.shape
        assert b * c == self._n, "input B*C must match the target feature's B*C"
        _, loss = _gram_and_loss_padded(
            x, self._target_pad, compute_dtype=self._compute_dtype,
            precision=self._precision, max_tile_cols=max_tile_cols, split=split)
        self.loss = loss
        return x                                       # passthrough, like PyTorch


# --------------------------------------------------------------------------
# Pure-JAX reference + self-test
# --------------------------------------------------------------------------
def _reference_gram(t, compute_dtype=None):
    b, c, h, w = t.shape
    f = t.reshape(b * c, h * w)
    if compute_dtype is not None:
        f = f.astype(compute_dtype)
    g = jnp.dot(f, f.T, preferred_element_type=jnp.float32)
    return g / (b * c * h * w)


def _reference(x, target_feature, compute_dtype=None):
    g = _reference_gram(x, compute_dtype)
    tgt = _reference_gram(target_feature, compute_dtype)
    return jnp.mean((g - tgt) ** 2)


if __name__ == "__main__":
    key = jax.random.PRNGKey(0)
    k1, k2, k3, k4, k5, k6 = jax.random.split(key, 6)

    # 1) Lane-aligned H*W, single K tile, fused gram+loss kernel.
    B, C, H, W = 2, 4, 16, 16
    target_feature = jax.random.normal(k1, (B, C, H, W), jnp.float32)
    x = jax.random.normal(k2, (B, C, H, W), jnp.float32)

    module = StyleLoss(target_feature)          # target Gram via gram-only kernel
    out = jax.block_until_ready(module(x))      # forward: Gram + MSE via Pallas
    loss = jax.block_until_ready(module.loss)
    ref_loss = _reference(x, target_feature)
    assert out.shape == x.shape and jnp.allclose(out, x)
    assert jnp.allclose(loss, ref_loss, rtol=1e-5, atol=1e-6), (loss, ref_loss)
    assert jnp.allclose(module.target, _reference_gram(target_feature),
                        rtol=1e-5, atol=1e-6)

    # 2) H*W not divisible by 128 exercises the (<=127-column) zero-pad path.
    H2, W2 = 15, 15
    tf2 = jax.random.normal(k3, (B, C, H2, W2), jnp.float32)
    x2 = jax.random.normal(k4, (B, C, H2, W2), jnp.float32)
    m2 = StyleLoss(tf2)
    out2 = jax.block_until_ready(m2(x2))
    loss2 = jax.block_until_ready(m2.loss)
    ref2 = _reference(x2, tf2)
    assert jnp.allclose(out2, x2)
    assert jnp.allclose(loss2, ref2, rtol=1e-5, atol=1e-6), (loss2, ref2)

    # 3) Multi-tile K accumulation (forced narrow tile) and the dual-TensorCore
    #    split path with its combine kernel.
    B3, C3, H3, W3 = 1, 8, 32, 32
    tf3 = jax.random.normal(k5, (B3, C3, H3, W3), jnp.float32)
    x3 = jax.random.normal(k6, (B3, C3, H3, W3), jnp.float32)
    ref3 = _reference(x3, tf3)
    m3 = StyleLoss(tf3)
    m3(x3, max_tile_cols=128, split=False)      # 8 K steps, fused kernel
    loss3a = jax.block_until_ready(m3.loss)
    m3(x3, max_tile_cols=256, split=True)       # (2 parallel) x (2 K) + combine
    loss3b = jax.block_until_ready(m3.loss)
    assert jnp.allclose(loss3a, ref3, rtol=1e-5, atol=1e-6), (loss3a, ref3)
    assert jnp.allclose(loss3b, ref3, rtol=1e-5, atol=1e-6), (loss3b, ref3)

    # 4) Optional bf16 feature-stream knob (bandwidth/numerics trade-off).
    m4 = StyleLoss(target_feature, compute_dtype=jnp.bfloat16)
    m4(x)
    loss4 = jax.block_until_ready(m4.loss)
    ref4 = _reference(x, target_feature, compute_dtype=jnp.bfloat16)
    assert jnp.allclose(loss4, ref4, rtol=2e-2, atol=1e-5), (loss4, ref4)

    print("KERNEL_OK")
</pallas_src>

<mosaic_0001>
module attributes {stable_mosaic.version = 11 : i64} {
  func.func @_gram_kernel(%arg0: i32, %arg1: memref<8x256xf32, #tpu.memory_space<vmem>>, %arg2: memref<8x8xf32, #tpu.memory_space<vmem>>) attributes {dimension_semantics = [#tpu.dimension_semantics<arbitrary>], iteration_bounds = array<i64: 1>, scalar_prefetch = 0 : i64, scratch_operands = 0 : i64, tpu.core_type = #tpu.core_type<tc>, window_params = [{transform_indices = @transform_0, window_bounds = array<i64: 8, 256>}, {pipeline_mode = #tpu.pipeline_mode<synchronous>, transform_indices = @transform_1, window_bounds = array<i64: 8, 8>}]} {
    %c0_i32 = arith.constant 0 : i32
    %0 = arith.cmpi eq, %arg0, %c0_i32 : i32
    %1 = arith.extui %0 : i1 to i32
    %c0_i32_0 = arith.constant 0 : i32
    %2 = arith.cmpi ne, %1, %c0_i32_0 : i32
    scf.if %2 {
      %cst_8 = arith.constant 0.000000e+00 : f32
      %11 = vector.broadcast %cst_8 : f32 to vector<8x8xf32>
      %c0_9 = arith.constant 0 : index
      %c0_10 = arith.constant 0 : index
      %12 = vector.load %arg2[%c0_9, %c0_10] : memref<8x8xf32, #tpu.memory_space<vmem>>, vector<8x8xf32>
      tpu.vector_store %arg2[%c0_9, %c0_10], %11 {strides = array<i32>} : memref<8x8xf32, #tpu.memory_space<vmem>>, vector<8x8xf32>,
    } else {
    }
    %c0 = arith.constant 0 : index
    %c0_1 = arith.constant 0 : index
    %3 = vector.load %arg1[%c0, %c0_1] : memref<8x256xf32, #tpu.memory_space<vmem>>, vector<8x256xf32>
    %c0_2 = arith.constant 0 : index
    %c0_3 = arith.constant 0 : index
    %4 = vector.load %arg2[%c0_2, %c0_3] : memref<8x8xf32, #tpu.memory_space<vmem>>, vector<8x8xf32>
    %cst = arith.constant dense<0.000000e+00> : vector<8x8xf32>
    %5 = tpu.matmul %3, %3, %cst {dimension_numbers = #tpu.dot_dimension_numbers<[1], [1], [0], [0], [0, 0, 1, 0], [], []>} : vector<8x256xf32>, vector<8x256xf32>, vector<8x8xf32> -> vector<8x8xf32>
    %6 = arith.addf %4, %5 : vector<8x8xf32>
    %c0_4 = arith.constant 0 : index
    %c0_5 = arith.constant 0 : index
    %7 = vector.load %arg2[%c0_4, %c0_5] : memref<8x8xf32, #tpu.memory_space<vmem>>, vector<8x8xf32>
    tpu.vector_store %arg2[%c0_4, %c0_5], %6 {strides = array<i32>} : memref<8x8xf32, #tpu.memory_space<vmem>>, vector<8x8xf32>,
    %c0_i32_6 = arith.constant 0 : i32
    %8 = arith.cmpi eq, %arg0, %c0_i32_6 : i32
    %9 = arith.extui %8 : i1 to i32
    %c0_i32_7 = arith.constant 0 : i32
    %10 = arith.cmpi ne, %9, %c0_i32_7 : i32
    scf.if %10 {
      %c0_8 = arith.constant 0 : index
      %c0_9 = arith.constant 0 : index
      %11 = vector.load %arg2[%c0_8, %c0_9] : memref<8x8xf32, #tpu.memory_space<vmem>>, vector<8x8xf32>
      %cst_10 = arith.constant 4.8828125E-4 : f32
      %12 = vector.broadcast %cst_10 : f32 to vector<8x8xf32>
      %13 = arith.mulf %11, %12 : vector<8x8xf32>
      %c0_11 = arith.constant 0 : index
      %c0_12 = arith.constant 0 : index
      %14 = vector.load %arg2[%c0_11, %c0_12] : memref<8x8xf32, #tpu.memory_space<vmem>>, vector<8x8xf32>
      tpu.vector_store %arg2[%c0_11, %c0_12], %13 {strides = array<i32>} : memref<8x8xf32, #tpu.memory_space<vmem>>, vector<8x8xf32>,
    } else {
    }
    return
  }
  func.func @transform_0(%arg0: i32) -> (i32, i32) {
    %c0_i32 = arith.constant 0 : i32
    %c0_i32_0 = arith.constant 0 : i32
    return %c0_i32, %arg0 : i32, i32
  }
  func.func @transform_1(%arg0: i32) -> (i32, i32) {
    %c0_i32 = arith.constant 0 : i32
    %c0_i32_0 = arith.constant 0 : i32
    %c0_i32_1 = arith.constant 0 : i32
    return %c0_i32, %c0_i32_0 : i32, i32
  }
}

</mosaic_0001>

<llo_original>
// kernel: tpu_custom_call.1
$region0: #{tpu_custom_call.1}
  #allocation0 [shape = 'u32[]', space=smem, size = 0x4, offset = 0x4, fixed_abs, tag = 'smem constant byte address 0x4 - core index']
  #allocation1 [shape = 'u32[144,128]{1,0:T(1,128)}', space=vmem, size = 0x12000, scoped, tag = 'internal scratch']
  %s0 = inlined_call_operand.hbm [shape: f32[8,256], index: 0, kind: input, shape index: {}]
  %s1 = inlined_call_operand.hbm [shape: f32[8,8], index: 1, kind: output, shape index: {}]
  %s2 = sld [smem:[#allocation0]]
  $region26: #{tpu_custom_call.1} parent=0
    _
  %s4 = ssub.s32 1, %s2
  %s5 = scalar_select 0, %s4, %s2
  $region1: #{tpu_custom_call.1} parent=0
    #allocation2 [shape = 'u8[8192]{0}', space=vmem, size = 0x2000, scoped, tag = 'input window, operand 0, single buffered']
    #allocation3 [shape = 's32[1]{0}', space=sflag, size = 0x4, scoped, tag = 'scoped memory for tpu_custom_call.1']
    #allocation4 [shape = 's32[1]{0}', space=sflag, size = 0x4, scoped, tag = 'scoped memory for tpu_custom_call.1']
    #allocation5 [shape = 'u8[4096]{0}', space=vmem, size = 0x1000, scoped, tag = 'output window, operand 0, single buffered']
    %6 = vsyncpa [#allocation3], 0
    %7 = vsyncpa [#allocation4], 0
    // Predicated region
    $region2: #{tpu_custom_call.1} parent=1 // pred_check
      _
    $region3: #{tpu_custom_call.1} parent=1 // pred_check_branch
      %9 = sbr.rel (0) target = $region5
    $region4: #{tpu_custom_call.1} parent=1 // pred_region
      %s11 = ssub.s32 256, 256
      %12 = vsyncadd [#allocation3], %s11
      %s14 = sshll.u32 [#allocation2], 4
      %s15 = int_to_ptr.vmem [resolvable:$true] %s14
      %17 = dma.hbm_to_vmem [thread:$0]  %s0, 256, %s15, [#allocation3]
    $region5: #{tpu_custom_call.1} parent=1 // pred_fallthru
      _
    // Predicated region
    $region6: #{tpu_custom_call.1} parent=1 // pred_check
      _
    $region7: #{tpu_custom_call.1} parent=1 // pred_check_branch
      %19 = sbr.rel (0) target = $region9
    $region8: #{tpu_custom_call.1} parent=1 // pred_region
      %20 = dma.done [#allocation3], 256
    $region9: #{tpu_custom_call.1} parent=1 // pred_fallthru
      _
    %p21 = scmp.eq.s32.totalorder 0, 0
    // Predicated region
    $region10: #{tpu_custom_call.1} parent=1 // pred_check
      %p22 = pneg %p21
    $region11: #{tpu_custom_call.1} parent=1 // pred_check_branch
      %24 = sbr.rel (%p22) target = $region13
    $region12: #{tpu_custom_call.1} parent=1 // pred_region
      %vm25 = vcmask 64512
      %26 = vst.msk [vmem:[#allocation5] sm:$0xff] %vm25, 0.0
    $region13: #{tpu_custom_call.1} parent=1 // pred_fallthru
      _
    %v27 = vld [vmem:[#allocation2] sm:$0xff]
    %v28 = vld [vmem:[#allocation2 + $0x8] sm:$0xff]
    %v29 = vld [vmem:[#allocation5] sm:$0xff]
    %30 = vmatprep.subr.mxu0 %v28
    %31 = vmatpush1.xpose.msra.mxu0 %v27
    %32 = vmatprep.subr.mxu0 0.0
    %33 = vmatpush1.xpose.msra.mxu0 0.0
    %34 = vmatprep.subr.mxu0 0.0
    %35 = vmatpush1.xpose.msra.mxu0 0.0
    %36 = vmatprep.subr.mxu0 0.0
    %37 = vmatpush1.xpose.msra.mxu0 0.0
    %38 = vmatprep.subr.mxu0 0.0
    %39 = vmatpush1.xpose.msra.mxu0 0.0
    %40 = vmatprep.subr.mxu0 0.0
    %41 = vmatpush1.xpose.msra.mxu0 0.0
    %42 = vmatprep.subr.mxu0 0.0
    %43 = vmatpush1.xpose.msra.mxu0 0.0
    %44 = vmatprep.subr.mxu0 0.0
    %45 = vmatpush1.xpose.msra.mxu0 0.0
    %46 = vmatprep.subr.mxu0 0.0
    %47 = vmatpush1.xpose.msra.mxu0 0.0
    %48 = vmatprep.subr.mxu0 0.0
    %49 = vmatpush1.xpose.msra.mxu0 0.0
    %50 = vmatprep.subr.mxu0 0.0
    %51 = vmatpush1.xpose.msra.mxu0 0.0
    %52 = vmatprep.subr.mxu0 0.0
    %53 = vmatpush1.xpose.msra.mxu0 0.0
    %54 = vmatprep.subr.mxu0 0.0
    %55 = vmatpush1.xpose.msra.mxu0 0.0
    %56 = vmatprep.subr.mxu0 0.0
    %57 = vmatpush1.xpose.msra.mxu0 0.0
    %58 = vmatprep.subr.mxu0 0.0
    %59 = vmatpush1.xpose.msra.mxu0 0.0
    %60 = vmatprep.subr.mxu0 0.0
    %61 = vmatpush1.xpose.msra.mxu0 0.0
    %62 = vmatprep.subr.mxu0 0.0
    %63 = vmatpush1.xpose.msra.mxu0 0.0
    %64 = vmatprep.subr.mxu0 0.0
    %65 = vmatpush1.xpose.msra.mxu0 0.0
    %66 = vmatprep.subr.mxu0 0.0
    %67 = vmatpush1.xpose.msra.mxu0 0.0
    %68 = vmatprep.subr.mxu0 0.0
    %69 = vmatpush1.xpose.msra.mxu0 0.0
    %70 = vmatprep.subr.mxu0 0.0
    %71 = vmatpush1.xpose.msra.mxu0 0.0
    %72 = vmatprep.subr.mxu0 0.0
    %73 = vmatpush1.xpose.msra.mxu0 0.0
    %74 = vmatprep.subr.mxu0 0.0
    %75 = vmatpush1.xpose.msra.mxu0 0.0
    %76 = vmatprep.subr.mxu0 0.0
    %77 = vmatpush1.xpose.msra.mxu0 0.0
    %78 = vmatprep.subr.mxu0 0.0
    %79 = vmatpush1.xpose.msra.mxu0 0.0
    %80 = vmatprep.subr.mxu0 0.0
    %81 = vmatpush1.xpose.msra.mxu0 0.0
    %82 = vmatprep.subr.mxu0 0.0
    %83 = vmatpush1.xpose.msra.mxu0 0.0
    %84 = vmatprep.subr.mxu0 0.0
    %85 = vmatpush1.xpose.msra.mxu0 0.0
    %86 = vmatprep.subr.mxu0 0.0
    %87 = vmatpush1.xpose.msra.mxu0 0.0
    %88 = vmatprep.subr.mxu0 0.0
    %89 = vmatpush1.xpose.msra.mxu0 0.0
    %90 = vmatprep.subr.mxu0 0.0
    %91 = vmatpush1.xpose.msra.mxu0 0.0
    %92 = vmatprep.subr.mxu0 0.0
    %93 = vmatpush1.xpose.msra.mxu0 0.0
    %94 = vmatprep.mubr.f32.mxu0 %v28
    %95 = vmatmul.mubr.f32.gmra.mrb[0].mxu0 %v27
    %v96 = vpop.f32.mrb[0].mxu0
    %v97 = vadd.f32 0.0, %v96
    %v98 = vpop.f32.mrb[0].mxu0
    %99 = vdwg.mxu0
    %v100 = vadd.f32 %v29, %v97
    %vm101 = vcmask 64512
    %102 = vst.msk [vmem:[#allocation5] sm:$0xff] %vm101, %v100
    // Predicated region
    $region14: #{tpu_custom_call.1} parent=1 // pred_check
      %p103 = pneg %p21
    $region15: #{tpu_custom_call.1} parent=1 // pred_check_branch
      %105 = sbr.rel (%p103) target = $region17
    $region16: #{tpu_custom_call.1} parent=1 // pred_region
      %v106 = vld [vmem:[#allocation5] sm:$0xff]
      %v107 = vmul.f32 %v106, 0.00048828125
      %108 = vst.msk [vmem:[#allocation5] sm:$0xff] %vm101, %v107
    $region17: #{tpu_custom_call.1} parent=1 // pred_fallthru
      _
    // Predicated region
    $region18: #{tpu_custom_call.1} parent=1 // pred_check
      _
    $region19: #{tpu_custom_call.1} parent=1 // pred_check_branch
      %110 = sbr.rel (0) target = $region21
    $region20: #{tpu_custom_call.1} parent=1 // pred_region
      %s112 = ssub.s32 128, 128
      %113 = vsyncadd [#allocation4], %s112
      %s115 = sshll.u32 [#allocation5], 4
      %s116 = int_to_ptr.vmem [resolvable:$true] %s115
      %118 = dma.vmem_to_hbm [thread:$0]  %s116, 128, %s1, [#allocation4]
    $region21: #{tpu_custom_call.1} parent=1 // pred_fallthru
      _
    // Predicated region
    $region22: #{tpu_custom_call.1} parent=1 // pred_check
      _
    $region23: #{tpu_custom_call.1} parent=1 // pred_check_branch
      %120 = sbr.rel (0) target = $region25
    $region24: #{tpu_custom_call.1} parent=1 // pred_region
      %121 = dma.done [#allocation4], 128
    $region25: #{tpu_custom_call.1} parent=1 // pred_fallthru
      _
    %122 = vsyncpa [#allocation3], 1
    %123 = vsyncpa [#allocation4], 1

</llo_original>
